<compile_context>
chip_gen: v7x
topology: tpu7x:2x2x1
jax: 0.10.0
libtpu: 0.0.40
codegen_flags: <defaults>
</compile_context>

<pallas_src>
import functools

import jax
import jax.numpy as jnp
from jax.experimental import pallas as pl
from jax.experimental.pallas import tpu as pltpu


def _round_up(x, m):
    return (x + m - 1) // m * m


# ----------------------------------------------------------------------------
# Tiled matmul with K-accumulation and fused bias epilogue
# ----------------------------------------------------------------------------

def _matmul_kernel(a_ref, b_ref, bias_ref, o_ref, acc_ref):
    @pl.when(pl.program_id(2) == 0)
    def _init():
        acc_ref[...] = jnp.zeros_like(acc_ref)

    acc_ref[...] += jnp.dot(a_ref[...], b_ref[...],
                            preferred_element_type=jnp.float32)

    @pl.when(pl.program_id(2) == pl.num_programs(2) - 1)
    def _finalize():
        o_ref[...] = (acc_ref[...] + bias_ref[...]).astype(o_ref.dtype)


def pallas_matmul(a, b, bias=None, *, out_dtype=jnp.float32,
                  tm_max=256, tn_max=512, tk_max=512):
    """[M, K] @ [K, N] (+ bias) -> [M, N].  bf16 MXU inputs, f32 accumulation.

    Arbitrary shapes handled via zero padding to (8, 128)-aligned tiles.
    Grid order (N, M, K): the weight tile index is constant across the inner
    M loop at small K-grids, keeping big weight columns VMEM-resident.
    """
    M, K = a.shape
    K2, N = b.shape
    assert K == K2
    tm = min(tm_max, _round_up(M, 8))
    tn = min(tn_max, _round_up(N, 128))
    tk = min(tk_max, _round_up(K, 128))
    Mp, Kp, Np = _round_up(M, tm), _round_up(K, tk), _round_up(N, tn)

    a_p = jnp.pad(a.astype(jnp.bfloat16), ((0, Mp - M), (0, Kp - K)))
    b_p = jnp.pad(b.astype(jnp.bfloat16), ((0, Kp - K), (0, Np - N)))
    if bias is None:
        bias_p = jnp.zeros((1, Np), jnp.float32)
    else:
        bias_p = jnp.pad(bias.astype(jnp.float32).reshape(1, N),
                         ((0, 0), (0, Np - N)))

    out = pl.pallas_call(
        _matmul_kernel,
        out_shape=jax.ShapeDtypeStruct((Mp, Np), out_dtype),
        grid=(Np // tn, Mp // tm, Kp // tk),
        in_specs=[
            pl.BlockSpec((tm, tk), lambda n, m, k: (m, k)),
            pl.BlockSpec((tk, tn), lambda n, m, k: (k, n)),
            pl.BlockSpec((1, tn), lambda n, m, k: (0, n)),
        ],
        out_specs=pl.BlockSpec((tm, tn), lambda n, m, k: (m, n)),
        scratch_shapes=[pltpu.VMEM((tm, tn), jnp.float32)],
        compiler_params=pltpu.CompilerParams(
            dimension_semantics=("parallel", "parallel", "arbitrary")),
    )(a_p, b_p, bias_p)
    return out[:M, :N]


# ----------------------------------------------------------------------------
# Fused multi-head attention: all heads of one batch element per grid step,
# consuming the packed QKV activation directly.
# ----------------------------------------------------------------------------

def _attention_kernel(qkv_ref, bias_ref, o_ref, *, n_heads, head_dim, scale):
    H = n_heads * head_dim
    bias = bias_ref[0]                                   # (1, S) additive mask
    for h in range(n_heads):
        lo, hi = h * head_dim, (h + 1) * head_dim
        q = qkv_ref[0, :, lo:hi].astype(jnp.bfloat16)            # (S, hd)
        k = qkv_ref[0, :, H + lo:H + hi].astype(jnp.bfloat16)    # (S, hd)
        v = qkv_ref[0, :, 2 * H + lo:2 * H + hi].astype(jnp.bfloat16)
        # scores: contract head_dim of q with head_dim of k (no explicit k.T)
        s = jax.lax.dot_general(q, k, (((1,), (1,)), ((), ())),
                                preferred_element_type=jnp.float32)
        s = s * scale + bias
        s = s - jnp.max(s, axis=-1, keepdims=True)
        p = jnp.exp(s)
        p = p * pl.reciprocal(jnp.sum(p, axis=-1, keepdims=True), approx=True)
        ctx = jnp.dot(p.astype(jnp.bfloat16), v,
                      preferred_element_type=jnp.float32)
        o_ref[0, :, lo:hi] = ctx.astype(o_ref.dtype)


def pallas_attention(qkv, mask_bias, *, n_heads, head_dim):
    """qkv: [B, S, 3H] packed Q|K|V; mask_bias: [B, 1, S] -> [B, S, H]."""
    B, S, threeH = qkv.shape
    H = n_heads * head_dim
    assert threeH == 3 * H
    scale = 1.0 / (head_dim ** 0.5)
    kern = functools.partial(_attention_kernel, n_heads=n_heads,
                             head_dim=head_dim, scale=scale)
    return pl.pallas_call(
        kern,
        out_shape=jax.ShapeDtypeStruct((B, S, H), jnp.float32),
        grid=(B,),
        in_specs=[
            pl.BlockSpec((1, S, 3 * H), lambda b: (b, 0, 0)),
            pl.BlockSpec((1, 1, S), lambda b: (b, 0, 0)),
        ],
        out_specs=pl.BlockSpec((1, S, H), lambda b: (b, 0, 0)),
        compiler_params=pltpu.CompilerParams(
            dimension_semantics=("parallel",)),
    )(qkv, mask_bias)


# ----------------------------------------------------------------------------
# SPLADE pooling, tiled over the vocab dimension
# ----------------------------------------------------------------------------

def _splade_pool_kernel(x_ref, m_ref, o_ref):
    x = x_ref[0]                       # (S, tv) token logits slice
    m = m_ref[0]                       # (S, 1) attention mask
    y = jnp.log1p(jnp.maximum(x, 0.0)) * m       # log(1 + relu(x)) * mask
    o_ref[...] = jnp.max(y, axis=0, keepdims=True)


def pallas_splade_pool(token_embeddings, attention_mask, *, tv_max=1024):
    """token_embeddings: [B, S, V]; attention_mask: [B, S] -> [B, V]."""
    B, S, V = token_embeddings.shape
    tv = min(tv_max, _round_up(V, 128))
    Vp = _round_up(V, tv)
    x_p = jnp.pad(token_embeddings.astype(jnp.float32),
                  ((0, 0), (0, 0), (0, Vp - V)))
    mask3 = attention_mask.astype(jnp.float32).reshape(B, S, 1)
    out = pl.pallas_call(
        _splade_pool_kernel,
        out_shape=jax.ShapeDtypeStruct((B, Vp), jnp.float32),
        grid=(B, Vp // tv),
        in_specs=[
            pl.BlockSpec((1, S, tv), lambda b, v: (b, 0, v)),
            pl.BlockSpec((1, S, 1), lambda b, v: (b, 0, 0)),
        ],
        out_specs=pl.BlockSpec((1, tv), lambda b, v: (b, v)),
        compiler_params=pltpu.CompilerParams(
            dimension_semantics=("parallel", "parallel")),
    )(x_p, mask3)
    return out[:, :V]


# ----------------------------------------------------------------------------
# Glue: small BERT-style backbone + MLM head + SPLADE pooling + CE head
# ----------------------------------------------------------------------------

def layer_norm(x, gamma, beta, eps=1e-12):
    mu = jnp.mean(x, axis=-1, keepdims=True)
    var = jnp.mean((x - mu) ** 2, axis=-1, keepdims=True)
    return (x - mu) * jax.lax.rsqrt(var + eps) * gamma + beta


def init_params(key, *, vocab, hidden, ffn, max_pos, n_heads, dim):
    ks = jax.random.split(key, 20)
    std = 0.02
    wq = jax.random.normal(ks[3], (hidden, hidden)) * std
    wk = jax.random.normal(ks[4], (hidden, hidden)) * std
    wv = jax.random.normal(ks[5], (hidden, hidden)) * std
    p = {
        "word_emb": jax.random.normal(ks[0], (vocab, hidden)) * std,
        "pos_emb": jax.random.normal(ks[1], (max_pos, hidden)) * std,
        "type_emb": jax.random.normal(ks[2], (2, hidden)) * std,
        "ln_emb_g": jnp.ones((hidden,)), "ln_emb_b": jnp.zeros((hidden,)),
        # fused QKV projection
        "wqkv": jnp.concatenate([wq, wk, wv], axis=1),
        "bqkv": jnp.zeros((3 * hidden,)),
        "wo": jax.random.normal(ks[6], (hidden, hidden)) * std,
        "bo": jnp.zeros((hidden,)),
        "ln1_g": jnp.ones((hidden,)), "ln1_b": jnp.zeros((hidden,)),
        "w1": jax.random.normal(ks[7], (hidden, ffn)) * std,
        "b1": jnp.zeros((ffn,)),
        "w2": jax.random.normal(ks[8], (ffn, hidden)) * std,
        "b2": jnp.zeros((hidden,)),
        "ln2_g": jnp.ones((hidden,)), "ln2_b": jnp.zeros((hidden,)),
        # MLM head
        "wt": jax.random.normal(ks[9], (hidden, hidden)) * std,
        "bt": jnp.zeros((hidden,)),
        "lnt_g": jnp.ones((hidden,)), "lnt_b": jnp.zeros((hidden,)),
        "wd": jax.random.normal(ks[10], (hidden, vocab)) * std,
        "bd": jnp.zeros((vocab,)),
        # CETransformer head: linear -> GELU -> LayerNorm -> output(dim -> 1)
        "w_lin": jax.random.normal(ks[11], (hidden, dim)) * std,
        "b_lin": jnp.zeros((dim,)),
        "norm_g": jnp.ones((dim,)), "norm_b": jnp.zeros((dim,)),
        "w_out": jax.random.normal(ks[12], (dim, 1)) * std,
        "b_out": jnp.zeros((1,)),
    }
    return {k: v.astype(jnp.float32) for k, v in p.items()}


def ce_transformer_forward(params, features, *, n_heads):
    """CETransformer.forward: backbone (hidden states) + MLM logits + SPLADE
    pooling (inherited) + CLS scoring head."""
    input_ids = features["input_ids"]                    # [B, S] int32
    attention_mask = features["attention_mask"].astype(jnp.float32)  # [B, S]
    B, S = input_ids.shape
    V, H = params["word_emb"].shape
    hd = H // n_heads

    # Embeddings (gather + adds + LayerNorm stay in XLA: tiny, gather-bound)
    x = (params["word_emb"][input_ids]
         + params["pos_emb"][:S][None, :, :]
         + params["type_emb"][0][None, None, :])
    emb_out = layer_norm(x, params["ln_emb_g"], params["ln_emb_b"])

    x2 = emb_out.reshape(B * S, H)

    # Fused QKV projection (single matmul, fused bias)
    qkv = pallas_matmul(x2, params["wqkv"], params["bqkv"])      # [B*S, 3H]
    qkv = qkv.reshape(B, S, 3 * H)

    # Additive attention-mask bias, [B, 1, S] (no B*n_heads broadcast)
    mask_bias = ((1.0 - attention_mask) * -1e4).reshape(B, 1, S)

    ctx = pallas_attention(qkv, mask_bias, n_heads=n_heads, head_dim=hd)
    ctx2 = ctx.reshape(B * S, H)

    attn_out = pallas_matmul(ctx2, params["wo"], params["bo"])
    x2 = layer_norm(x2 + attn_out, params["ln1_g"], params["ln1_b"])

    # FFN
    # TODO(synk): fold the exact (erf) GELU into the matmul epilogue once erf
    # lowering on Mosaic is verified; kept in XLA for guaranteed compile.
    h = jax.nn.gelu(pallas_matmul(x2, params["w1"], params["b1"]),
                    approximate=False)
    ffn_out = pallas_matmul(h, params["w2"], params["b2"])
    x2 = layer_norm(x2 + ffn_out, params["ln2_g"], params["ln2_b"])

    layer_out = x2.reshape(B, S, H)                 # last encoder hidden state
    all_layer_embeddings = [emb_out, layer_out]     # hidden_states tuple

    # MLM head -> vocab logits (token_embeddings) + inherited SPLADE pooling
    t = jax.nn.gelu(pallas_matmul(x2, params["wt"], params["bt"]),
                    approximate=False)
    t = layer_norm(t, params["lnt_g"], params["lnt_b"])
    logits = pallas_matmul(t, params["wd"], params["bd"])        # [B*S, V]
    token_embeddings = logits.reshape(B, S, V)
    sentence_embedding = pallas_splade_pool(token_embeddings, attention_mask)

    # CETransformer head: output(norm(gelu(linear(last_hidden[:, 0, :]))))
    cls_tok = layer_out[:, 0, :]                                 # [B, H]
    z = jax.nn.gelu(pallas_matmul(cls_tok, params["w_lin"], params["b_lin"]),
                    approximate=False)
    z = layer_norm(z, params["norm_g"], params["norm_b"])
    cls = pallas_matmul(z, params["w_out"], params["b_out"])     # [B, 1]

    out = dict(features)
    out.update({
        "attention_mask": attention_mask,
        "all_layer_embeddings": all_layer_embeddings,
        "token_embeddings": token_embeddings,
        "sentence_embedding": sentence_embedding,
        "cls": cls,
    })
    return out


# ----------------------------------------------------------------------------
# Main
# ----------------------------------------------------------------------------

if __name__ == "__main__":
    B, S, H, V, NH, FFN = 2, 8, 32, 128, 2, 64
    DIM = H   # CETransformer dim (== hidden so LayerNorm(hidden) applies)

    key = jax.random.PRNGKey(0)
    kp, ki = jax.random.split(key)
    params = init_params(kp, vocab=V, hidden=H, ffn=FFN, max_pos=S,
                         n_heads=NH, dim=DIM)

    input_ids = jax.random.randint(ki, (B, S), 0, V, dtype=jnp.int32)
    attention_mask = jnp.ones((B, S), dtype=jnp.float32)
    attention_mask = attention_mask.at[1, -2:].set(0.0)   # padding in batch 1

    features = {"input_ids": input_ids, "attention_mask": attention_mask}

    out = ce_transformer_forward(params, features, n_heads=NH)
    jax.block_until_ready(out["cls"])
    jax.block_until_ready(out["sentence_embedding"])
    jax.block_until_ready(out["token_embeddings"])
    jax.block_until_ready(out["all_layer_embeddings"][-1])

    assert out["cls"].shape == (B, 1)
    assert out["token_embeddings"].shape == (B, S, V)
    assert out["sentence_embedding"].shape == (B, V)
    assert out["all_layer_embeddings"][-1].shape == (B, S, H)
    print("KERNEL_OK")
</pallas_src>

<mosaic_0001>
module attributes {stable_mosaic.version = 11 : i64} {
  func.func @_matmul_kernel(%arg0: i32, %arg1: i32, %arg2: i32, %arg3: memref<16x128xbf16, #tpu.memory_space<vmem>>, %arg4: memref<128x128xbf16, #tpu.memory_space<vmem>>, %arg5: memref<1x128xf32, #tpu.memory_space<vmem>>, %arg6: memref<16x128xf32, #tpu.memory_space<vmem>>, %arg7: memref<16x128xf32, #tpu.memory_space<vmem>>) attributes {dimension_semantics = [#tpu.dimension_semantics<parallel>, #tpu.dimension_semantics<parallel>, #tpu.dimension_semantics<arbitrary>], iteration_bounds = array<i64: 1, 1, 1>, scalar_prefetch = 0 : i64, scratch_operands = 1 : i64, tpu.core_type = #tpu.core_type<tc>, window_params = [{transform_indices = @transform_0, window_bounds = array<i64: 16, 128>}, {transform_indices = @transform_1, window_bounds = array<i64: 128, 128>}, {transform_indices = @transform_2, window_bounds = array<i64: 1, 128>}, {transform_indices = @transform_3, window_bounds = array<i64: 16, 128>}]} {
    %c0_i32 = arith.constant 0 : i32
    %0 = arith.cmpi eq, %arg2, %c0_i32 : i32
    %1 = arith.extui %0 : i1 to i32
    %c0_i32_0 = arith.constant 0 : i32
    %2 = arith.cmpi ne, %1, %c0_i32_0 : i32
    scf.if %2 {
      %cst_10 = arith.constant 0.000000e+00 : f32
      %12 = vector.broadcast %cst_10 : f32 to vector<16x128xf32>
      %c0_11 = arith.constant 0 : index
      %c0_12 = arith.constant 0 : index
      %13 = vector.load %arg7[%c0_11, %c0_12] : memref<16x128xf32, #tpu.memory_space<vmem>>, vector<16x128xf32>
      tpu.vector_store %arg7[%c0_11, %c0_12], %12 {strides = array<i32>} : memref<16x128xf32, #tpu.memory_space<vmem>>, vector<16x128xf32>,
    } else {
    }
    %c0 = arith.constant 0 : index
    %c0_1 = arith.constant 0 : index
    %3 = vector.load %arg7[%c0, %c0_1] : memref<16x128xf32, #tpu.memory_space<vmem>>, vector<16x128xf32>
    %c0_2 = arith.constant 0 : index
    %c0_3 = arith.constant 0 : index
    %4 = vector.load %arg3[%c0_2, %c0_3] : memref<16x128xbf16, #tpu.memory_space<vmem>>, vector<16x128xbf16>
    %c0_4 = arith.constant 0 : index
    %c0_5 = arith.constant 0 : index
    %5 = vector.load %arg4[%c0_4, %c0_5] : memref<128x128xbf16, #tpu.memory_space<vmem>>, vector<128x128xbf16>
    %cst = arith.constant dense<0.000000e+00> : vector<16x128xf32>
    %6 = tpu.matmul %4, %5, %cst {dimension_numbers = #tpu.dot_dimension_numbers<[1], [0], [0], [1], [0, 0, 1, 1], [], []>} : vector<16x128xbf16>, vector<128x128xbf16>, vector<16x128xf32> -> vector<16x128xf32>
    %7 = arith.addf %3, %6 : vector<16x128xf32>
    %c0_6 = arith.constant 0 : index
    %c0_7 = arith.constant 0 : index
    %8 = vector.load %arg7[%c0_6, %c0_7] : memref<16x128xf32, #tpu.memory_space<vmem>>, vector<16x128xf32>
    tpu.vector_store %arg7[%c0_6, %c0_7], %7 {strides = array<i32>} : memref<16x128xf32, #tpu.memory_space<vmem>>, vector<16x128xf32>,
    %c0_i32_8 = arith.constant 0 : i32
    %9 = arith.cmpi eq, %arg2, %c0_i32_8 : i32
    %10 = arith.extui %9 : i1 to i32
    %c0_i32_9 = arith.constant 0 : i32
    %11 = arith.cmpi ne, %10, %c0_i32_9 : i32
    scf.if %11 {
      %c0_10 = arith.constant 0 : index
      %c0_11 = arith.constant 0 : index
      %12 = vector.load %arg7[%c0_10, %c0_11] : memref<16x128xf32, #tpu.memory_space<vmem>>, vector<16x128xf32>
      %c0_12 = arith.constant 0 : index
      %c0_13 = arith.constant 0 : index
      %13 = vector.load %arg5[%c0_12, %c0_13] : memref<1x128xf32, #tpu.memory_space<vmem>>, vector<1x128xf32>
      %14 = vector.broadcast %13 : vector<1x128xf32> to vector<16x128xf32>
      %15 = arith.addf %12, %14 : vector<16x128xf32>
      %c0_14 = arith.constant 0 : index
      %c0_15 = arith.constant 0 : index
      %16 = vector.load %arg6[%c0_14, %c0_15] : memref<16x128xf32, #tpu.memory_space<vmem>>, vector<16x128xf32>
      tpu.vector_store %arg6[%c0_14, %c0_15], %15 {strides = array<i32>} : memref<16x128xf32, #tpu.memory_space<vmem>>, vector<16x128xf32>,
    } else {
    }
    return
  }
  func.func @transform_0(%arg0: i32, %arg1: i32, %arg2: i32) -> (i32, i32) {
    %c0_i32 = arith.constant 0 : i32
    return %arg1, %arg2 : i32, i32
  }
  func.func @transform_1(%arg0: i32, %arg1: i32, %arg2: i32) -> (i32, i32) {
    %c0_i32 = arith.constant 0 : i32
    return %arg2, %arg0 : i32, i32
  }
  func.func @transform_2(%arg0: i32, %arg1: i32, %arg2: i32) -> (i32, i32) {
    %c0_i32 = arith.constant 0 : i32
    %c0_i32_0 = arith.constant 0 : i32
    return %c0_i32, %arg0 : i32, i32
  }
  func.func @transform_3(%arg0: i32, %arg1: i32, %arg2: i32) -> (i32, i32) {
    %c0_i32 = arith.constant 0 : i32
    return %arg1, %arg0 : i32, i32
  }
}

</mosaic_0001>

<llo_original>
// kernel: tpu_custom_call.1
$region0: #{tpu_custom_call.1}
  #allocation0 [shape = 'u32[]', space=smem, size = 0x4, offset = 0x4, fixed_abs, tag = 'smem constant byte address 0x4 - core index']
  #allocation1 [shape = 'u32[144,128]{1,0:T(1,128)}', space=vmem, size = 0x12000, scoped, tag = 'internal scratch']
  #allocation2 [shape = 'f32[16,128]{1,0:T(8,128)}', space=vmem, size = 0x2000, scoped, tag = 'scratch operand']
  %s0 = inlined_call_operand.hbm [shape: bf16[16,128], index: 0, kind: input, shape index: {}]
  %s1 = inlined_call_operand.hbm [shape: bf16[128,128], index: 1, kind: input, shape index: {}]
  %s2 = inlined_call_operand.vmem [shape: f32[1,128], index: 2, kind: input, shape index: {}]
  %s3 = inlined_call_operand.hbm [shape: f32[16,128], index: 3, kind: output, shape index: {}]
  %s4 = sld [smem:[#allocation0]]
  $region38: #{tpu_custom_call.1} parent=0
    _
  %s6 = ssub.s32 1, %s4
  %s7 = scalar_select 0, %s6, %s4
  $region1: #{tpu_custom_call.1} parent=0
    #allocation3 [shape = 'u8[4096]{0}', space=vmem, size = 0x1000, scoped, tag = 'input window, operand 0, single buffered']
    #allocation4 [shape = 's32[1]{0}', space=sflag, size = 0x4, scoped, tag = 'scoped memory for tpu_custom_call.1']
    #allocation5 [shape = 's32[1]{0}', space=sflag, size = 0x4, scoped, tag = 'scoped memory for tpu_custom_call.1']
    #allocation6 [shape = 'u8[32768]{0}', space=vmem, size = 0x8000, scoped, tag = 'input window, operand 1, single buffered']
    #allocation7 [shape = 's32[1]{0}', space=sflag, size = 0x4, scoped, tag = 'scoped memory for tpu_custom_call.1']
    #allocation8 [shape = 'u8[8192]{0}', space=vmem, size = 0x2000, scoped, tag = 'output window, operand 0, single buffered']
    %8 = vsyncpa [#allocation4], 0
    %9 = vsyncpa [#allocation7], 0
    %10 = vsyncpa [#allocation5], 0
    // Predicated region
    $region2: #{tpu_custom_call.1} parent=1 // pred_check
      _
    $region3: #{tpu_custom_call.1} parent=1 // pred_check_branch
      %12 = sbr.rel (0) target = $region5
    $region4: #{tpu_custom_call.1} parent=1 // pred_region
      %s14 = ssub.s32 128, 128
      %15 = vsyncadd [#allocation4], %s14
      %s16 = sshll.u32 [#allocation3], 4
      %s17 = int_to_ptr.vmem [resolvable:$true] %s16
      %22 = dma.hbm_to_vmem [thread:$0]  %s0, 128, %s17, [#allocation4], 64, 64, 4
    $region5: #{tpu_custom_call.1} parent=1 // pred_fallthru
      _
    // Predicated region
    $region6: #{tpu_custom_call.1} parent=1 // pred_check
      _
    $region7: #{tpu_custom_call.1} parent=1 // pred_check_branch
      %24 = sbr.rel (0) target = $region9
    $region8: #{tpu_custom_call.1} parent=1 // pred_region
      %s26 = ssub.s32 1024, 1024
      %27 = vsyncadd [#allocation7], %s26
      %s28 = sshll.u32 [#allocation6], 4
      %s29 = int_to_ptr.vmem [resolvable:$true] %s28
      %34 = dma.hbm_to_vmem [thread:$0]  %s1, 1024, %s29, [#allocation7], 64, 64, 4
    $region9: #{tpu_custom_call.1} parent=1 // pred_fallthru
      _
    // Predicated region
    $region10: #{tpu_custom_call.1} parent=1 // pred_check
      _
    $region11: #{tpu_custom_call.1} parent=1 // pred_check_branch
      %36 = sbr.rel (0) target = $region13
    $region12: #{tpu_custom_call.1} parent=1 // pred_region
      _
    $region13: #{tpu_custom_call.1} parent=1 // pred_fallthru
      _
    // Predicated region
    $region14: #{tpu_custom_call.1} parent=1 // pred_check
      _
    $region15: #{tpu_custom_call.1} parent=1 // pred_check_branch
      %38 = sbr.rel (0) target = $region17
    $region16: #{tpu_custom_call.1} parent=1 // pred_region
      %39 = dma.done [#allocation4], 128
    $region17: #{tpu_custom_call.1} parent=1 // pred_fallthru
      _
    // Predicated region
    $region18: #{tpu_custom_call.1} parent=1 // pred_check
      _
    $region19: #{tpu_custom_call.1} parent=1 // pred_check_branch
      %41 = sbr.rel (0) target = $region21
    $region20: #{tpu_custom_call.1} parent=1 // pred_region
      %42 = dma.done [#allocation7], 1024
    $region21: #{tpu_custom_call.1} parent=1 // pred_fallthru
      _
    %p44 = scmp.eq.s32.totalorder 0, 0
    // Predicated region
    $region22: #{tpu_custom_call.1} parent=1 // pred_check
      %p45 = pneg %p44
    $region23: #{tpu_custom_call.1} parent=1 // pred_check_branch
      %47 = sbr.rel (%p45) target = $region25
    $region24: #{tpu_custom_call.1} parent=1 // pred_region
      %48 = vst [vmem:[#allocation2] sm:$0xff] 0.0
      %49 = vst [vmem:[#allocation2 + $0x8] sm:$0xff] 0.0
    $region25: #{tpu_custom_call.1} parent=1 // pred_fallthru
      _
    %v50 = vld [vmem:[#allocation2] sm:$0xff]
    %v51 = vld [vmem:[#allocation2 + $0x8] sm:$0xff]
    %v52 = vld [vmem:[#allocation3] sm:$0xf]
    %v53 = vld [vmem:[#allocation3 + $0x4] sm:$0xf]
    %v54 = vld [vmem:[#allocation6] sm:$0xf]
    %v55 = vld [vmem:[#allocation6 + $0x4] sm:$0xf]
    %v56 = vld [vmem:[#allocation6 + $0x8] sm:$0xf]
    %v57 = vld [vmem:[#allocation6 + $0xc] sm:$0xf]
    %v58 = vld [vmem:[#allocation6 + $0x10] sm:$0xf]
    %v59 = vld [vmem:[#allocation6 + $0x14] sm:$0xf]
    %v60 = vld [vmem:[#allocation6 + $0x18] sm:$0xf]
    %v61 = vld [vmem:[#allocation6 + $0x1c] sm:$0xf]
    %v62 = vld [vmem:[#allocation6 + $0x20] sm:$0xf]
    %v63 = vld [vmem:[#allocation6 + $0x24] sm:$0xf]
    %v64 = vld [vmem:[#allocation6 + $0x28] sm:$0xf]
    %v65 = vld [vmem:[#allocation6 + $0x2c] sm:$0xf]
    %v66 = vld [vmem:[#allocation6 + $0x30] sm:$0xf]
    %v67 = vld [vmem:[#allocation6 + $0x34] sm:$0xf]
    %v68 = vld [vmem:[#allocation6 + $0x38] sm:$0xf]
    %v69 = vld [vmem:[#allocation6 + $0x3c] sm:$0xf]
    %v72 = vunpack.c.l.b16 %v52
    %v73 = vunpack.c.l.b16 %v53
    %v74 = vpack.c.b16 %v73, %v72
    %v92 = vunpack.c.l.b16 %v54
    %v93 = vunpack.c.l.b16 %v55
    %v94 = vunpack.c.l.b16 %v56
    %v95 = vunpack.c.l.b16 %v57
    %v96 = vunpack.c.l.b16 %v58
    %v97 = vunpack.c.l.b16 %v59
    %v98 = vunpack.c.l.b16 %v60
    %v99 = vunpack.c.l.b16 %v61
    %v100 = vunpack.c.l.b16 %v62
    %v101 = vunpack.c.l.b16 %v63
    %v102 = vunpack.c.l.b16 %v64
    %v103 = vunpack.c.l.b16 %v65
    %v104 = vunpack.c.l.b16 %v66
    %v105 = vunpack.c.l.b16 %v67
    %v106 = vunpack.c.l.b16 %v68
    %v107 = vunpack.c.l.b16 %v69
    %v108 = vpack.c.b16 %v93, %v92
    %v109 = vpack.c.b16 %v95, %v94
    %v110 = vpack.c.b16 %v97, %v96
    %v111 = vpack.c.b16 %v99, %v98
    %v112 = vpack.c.b16 %v101, %v100
    %v113 = vpack.c.b16 %v103, %v102
    %v114 = vpack.c.b16 %v105, %v104
    %v115 = vpack.c.b16 %v107, %v106
    %124 = vmatprep.subr.bf16.mxu0 0
    %125 = vmatpush1.bf16.msra.mxu0 %v108
    %126 = vmatprep.subr.bf16.mxu0 0
    %127 = vmatpush1.bf16.msra.mxu0 %v109
    %128 = vmatprep.subr.bf16.mxu0 0
    %129 = vmatpush1.bf16.msra.mxu0 %v110
    %130 = vmatprep.subr.bf16.mxu0 0
    %131 = vmatpush1.bf16.msra.mxu0 %v111
    %132 = vmatprep.subr.bf16.mxu0 0
    %133 = vmatpush1.bf16.msra.mxu0 %v112
    %134 = vmatprep.subr.bf16.mxu0 0
    %135 = vmatpush1.bf16.msra.mxu0 %v113
    %136 = vmatprep.subr.bf16.mxu0 0
    %137 = vmatpush1.bf16.msra.mxu0 %v114
    %138 = vmatprep.subr.bf16.mxu0 0
    %139 = vmatpush1.bf16.msra.mxu0 %v115
    %140 = vmatprep.subr.bf16.mxu0 0
    %141 = vmatpush1.bf16.msra.mxu0 0
    %142 = vmatprep.subr.bf16.mxu0 0
    %143 = vmatpush1.bf16.msra.mxu0 0
    %144 = vmatprep.subr.bf16.mxu0 0
    %145 = vmatpush1.bf16.msra.mxu0 0
    %146 = vmatprep.subr.bf16.mxu0 0
    %147 = vmatpush1.bf16.msra.mxu0 0
    %148 = vmatprep.subr.bf16.mxu0 0
    %149 = vmatpush1.bf16.msra.mxu0 0
    %150 = vmatprep.subr.bf16.mxu0 0
    %151 = vmatpush1.bf16.msra.mxu0 0
    %152 = vmatprep.subr.bf16.mxu0 0
    %153 = vmatpush1.bf16.msra.mxu0 0
    %154 = vmatprep.subr.bf16.mxu0 0
    %155 = vmatpush1.bf16.msra.mxu0 0
    %156 = vmatprep.mubr.bf16.mxu0 0
    %157 = vmatmul.mubr.bf16.gmra.mrb[0].mxu0 %v74
    %v158 = vpop.f32.mrb[0].mxu0
    %v159 = vadd.f32 0.0, %v158
    %v160 = vpop.f32.mrb[0].mxu0
    %v161 = vpop.f32.mrb[0].mxu0
    %v162 = vadd.f32 0.0, %v161
    %v163 = vpop.f32.mrb[0].mxu0
    %164 = vdwg.mxu0
    %v165 = vadd.f32 %v50, %v159
    %v166 = vadd.f32 %v51, %v162
    %167 = vst [vmem:[#allocation2] sm:$0xff] %v165
    %168 = vst [vmem:[#allocation2 + $0x8] sm:$0xff] %v166
    // Predicated region
    $region26: #{tpu_custom_call.1} parent=1 // pred_check
      %p169 = pneg %p44
    $region27: #{tpu_custom_call.1} parent=1 // pred_check_branch
      %171 = sbr.rel (%p169) target = $region29
    $region28: #{tpu_custom_call.1} parent=1 // pred_region
      %v172 = vld [vmem:[#allocation2] sm:$0xff]
      %v173 = vld [vmem:[#allocation2 + $0x8] sm:$0xff]
      %v174 = vld [vmem:[%s2] sm:$0x1]
      %v176 = vlaneseq
      %v177 = vshrl.u32 %v176, 7
      %v178 = vsub.s32 0, %v177
      %v179 = vrot.slane %v174, %v178
      %v181 = vadd.f32 %v172, %v179
      %v182 = vadd.f32 %v173, %v179
      %183 = vst [vmem:[#allocation8] sm:$0xff] %v181
      %184 = vst [vmem:[#allocation8 + $0x8] sm:$0xff] %v182
    $region29: #{tpu_custom_call.1} parent=1 // pred_fallthru
      _
    // Predicated region
    $region30: #{tpu_custom_call.1} parent=1 // pred_check
      _
    $region31: #{tpu_custom_call.1} parent=1 // pred_check_branch
      %186 = sbr.rel (0) target = $region33
    $region32: #{tpu_custom_call.1} parent=1 // pred_region
      %s188 = ssub.s32 256, 256
      %189 = vsyncadd [#allocation5], %s188
      %s190 = sshll.u32 [#allocation8], 4
      %s191 = int_to_ptr.vmem [resolvable:$true] %s190
      %196 = dma.vmem_to_hbm [thread:$0]  %s191, 256, %s3, [#allocation5], 128, 128, 8
    $region33: #{tpu_custom_call.1} parent=1 // pred_fallthru
      _
    // Predicated region
    $region34: #{tpu_custom_call.1} parent=1 // pred_check
      _
    $region35: #{tpu_custom_call.1} parent=1 // pred_check_branch
      %198 = sbr.rel (0) target = $region37
    $region36: #{tpu_custom_call.1} parent=1 // pred_region
      %199 = dma.done [#allocation5], 256
    $region37: #{tpu_custom_call.1} parent=1 // pred_fallthru
      _
    %200 = vsyncpa [#allocation4], 1
    %201 = vsyncpa [#allocation7], 1
    %202 = vsyncpa [#allocation5], 1

</llo_original>
